<compile_context>
chip_gen: v6e
topology: v6e:2x2x1
jax: 0.10.0
libtpu: 0.0.40
codegen_flags: <defaults>
</compile_context>

<pallas_src>
import functools

import jax
import jax.numpy as jnp
from jax.experimental import pallas as pl
from jax.experimental.pallas import tpu as pltpu


def _round_up(x, m):
    return ((x + m - 1) // m) * m


def _elementwise_bf16_ok():
    """bf16 VPU/EUP exists on v6e/v7x; v5e (and unknown chips) stay f32."""
    try:
        kind = jax.devices()[0].device_kind.lower()
    except Exception:
        return False
    return ("v6" in kind) or ("v7" in kind)


def fn_net_kernel(xT_ref, w1_ref, b1_ref, w2_ref, b2_ref, w3_ref, b3_ref,
                  o_ref, *, mxu_dtype, ew_dtype):
    # xT_ref: (in_dim, batch_tile)  -- batch on the lane axis (lane-dense)
    # w*_ref: PyTorch layout (out_features, in_features); w1 f32, w2/w3 mxu_dtype
    # b*_ref: (out_features, 1) f32 columns (broadcast along lanes)
    x = xT_ref[...]

    # Layer 1: input -> hidden (K=4).  Fully f32: negligible MXU cost and it
    # preserves raw-input precision for large-magnitude OU states.
    h = jnp.dot(w1_ref[...], x, preferred_element_type=jnp.float32)
    h = jnp.tanh((h + b1_ref[...]).astype(ew_dtype))

    # Layer 2: hidden -> hidden (bf16 MXU inputs when enabled, f32 accumulate).
    h = jnp.dot(w2_ref[...], h.astype(mxu_dtype),
                preferred_element_type=jnp.float32)
    h = jnp.tanh((h + b2_ref[...]).astype(ew_dtype))

    # Layer 3: hidden -> output, linear.
    o = jnp.dot(w3_ref[...], h.astype(mxu_dtype),
                preferred_element_type=jnp.float32)
    o_ref[...] = (o + b3_ref[...]).astype(o_ref.dtype)


@functools.partial(jax.jit, static_argnames=("batch_tile", "use_bf16", "bf16_tanh"))
def _fn_net_fm_call(xT, w1, b1, w2, b2, w3, b3, *, batch_tile, use_bf16, bf16_tanh):
    in_dim, n = xT.shape
    hid = w1.shape[0]
    out_dim = w3.shape[0]

    mxu_dtype = jnp.bfloat16 if use_bf16 else jnp.float32
    ew_dtype = jnp.bfloat16 if (use_bf16 and bf16_tanh) else jnp.float32

    xT = xT.astype(jnp.float32)
    n_tiles = pl.cdiv(n, batch_tile)
    n_pad = n_tiles * batch_tile
    if n_pad != n:
        # Ragged batch: pad the lane axis (zeros in -> finite garbage out,
        # sliced off below).  Only triggers for non-multiple-of-tile batches.
        xT = jnp.pad(xT, ((0, 0), (0, n_pad - n)))

    w1c = w1.astype(jnp.float32)
    w2c = w2.astype(mxu_dtype)
    w3c = w3.astype(mxu_dtype)
    b1c = b1.reshape(hid, 1).astype(jnp.float32)
    b2c = b2.reshape(hid, 1).astype(jnp.float32)
    b3c = b3.reshape(out_dim, 1).astype(jnp.float32)

    # Per-tile VMEM estimate: double-buffered I/O tiles + live intermediates
    # (conservative: ~4 hid-wide f32 slabs) + resident weights.  Clamp to
    # [32 MiB, 56 MiB]: above v5e's 16 MiB default, below v7x's 64 MiB physical.
    params_bytes = 4 * (w1.size + b1.size + w2.size + b2.size + w3.size + b3.size)
    vmem_est = (2 * batch_tile * 4 * (in_dim + out_dim)
                + 4 * batch_tile * 4 * hid
                + params_bytes)
    vmem_limit = int(min(max(2 * vmem_est, 32 * 1024 * 1024), 56 * 1024 * 1024))

    cost = pl.CostEstimate(
        flops=2 * n_pad * (in_dim * hid + hid * hid + hid * out_dim),
        transcendentals=2 * n_pad * hid,
        bytes_accessed=4 * n_pad * (in_dim + out_dim) + params_bytes,
    )

    # Constant-index specs: weights/biases are fetched once and stay
    # VMEM-resident across grid steps (Pallas skips re-DMA for unchanged blocks).
    full = lambda shape: pl.BlockSpec(shape, lambda i: (0, 0))

    out_fm = pl.pallas_call(
        functools.partial(fn_net_kernel, mxu_dtype=mxu_dtype, ew_dtype=ew_dtype),
        out_shape=jax.ShapeDtypeStruct((out_dim, n_pad), jnp.float32),
        grid_spec=pl.GridSpec(
            grid=(n_tiles,),
            in_specs=[
                pl.BlockSpec((in_dim, batch_tile), lambda i: (0, i)),  # x^T tile
                full((hid, in_dim)),    # W1 (f32)
                full((hid, 1)),         # b1
                full((hid, hid)),       # W2
                full((hid, 1)),         # b2
                full((out_dim, hid)),   # W3
                full((out_dim, 1)),     # b3
            ],
            out_specs=pl.BlockSpec((out_dim, batch_tile), lambda i: (0, i)),
        ),
        compiler_params=pltpu.CompilerParams(
            dimension_semantics=("parallel",),
            vmem_limit_bytes=vmem_limit,
        ),
        cost_estimate=cost,
    )(xT, w1c, b1c, w2c, b2c, w3c, b3c)

    if n_pad != n:
        out_fm = out_fm[:, :n]
    return out_fm


def fn_net_forward_fm(xT, w1, b1, w2, b2, w3, b3, *,
                      batch_tile=32768, use_bf16=True, bf16_tanh=None):
    """Feature-major forward: xT [in_dim, n] -> [out_dim, n] (no transposes)."""
    if bf16_tanh is None:
        bf16_tanh = bool(use_bf16) and _elementwise_bf16_ok()
    n = xT.shape[1]
    bt = min(int(batch_tile), _round_up(n, 256))
    bt = max(_round_up(bt, 256), 256)
    return _fn_net_fm_call(xT, w1, b1, w2, b2, w3, b3,
                           batch_tile=bt, use_bf16=bool(use_bf16),
                           bf16_tanh=bool(bf16_tanh))


def fn_net_forward(x, w1, b1, w2, b2, w3, b3, **kwargs):
    """Batch-major compatibility wrapper matching PyTorch: x [n, in_dim] -> [n, out_dim].

    Note: adds one transpose pass each way; prefer fn_net_forward_fm when the
    surrounding pipeline can keep activations feature-major.
    """
    return fn_net_forward_fm(x.T, w1, b1, w2, b2, w3, b3, **kwargs).T


def init_params(key, input_dim, hid_size, output_dim):
    """Mimics nn.Linear default init: U(-1/sqrt(fan_in), +1/sqrt(fan_in))."""
    def linear(key, fan_in, fan_out):
        kw, kb = jax.random.split(key)
        bound = float(fan_in) ** -0.5
        w = jax.random.uniform(kw, (fan_out, fan_in), jnp.float32, -bound, bound)
        b = jax.random.uniform(kb, (fan_out,), jnp.float32, -bound, bound)
        return w, b

    k1, k2, k3 = jax.random.split(key, 3)
    w1, b1 = linear(k1, input_dim, hid_size)
    w2, b2 = linear(k2, hid_size, hid_size)
    w3, b3 = linear(k3, hid_size, output_dim)
    return w1, b1, w2, b2, w3, b3


def reference_forward(x, w1, b1, w2, b2, w3, b3, *, use_bf16=True, bf16_tanh=False):
    """Pure-JAX reference (batch-major) mirroring the kernel's dtype choices."""
    mxu = jnp.bfloat16 if use_bf16 else jnp.float32
    ew = jnp.bfloat16 if (use_bf16 and bf16_tanh) else jnp.float32
    x = x.astype(jnp.float32)
    h = jnp.dot(x, w1.T, preferred_element_type=jnp.float32) + b1
    h = jnp.tanh(h.astype(ew))
    h = jnp.dot(h.astype(mxu), w2.astype(mxu).T,
                preferred_element_type=jnp.float32) + b2
    h = jnp.tanh(h.astype(ew))
    return jnp.dot(h.astype(mxu), w3.astype(mxu).T,
                   preferred_element_type=jnp.float32) + b3


if __name__ == "__main__":
    # 2D OU process: 4 input features, 2 output features, small hidden layer.
    INPUT_DIM, OUTPUT_DIM, HID_SIZE = 4, 2, 32

    key = jax.random.PRNGKey(0)
    kx, kx2, kp = jax.random.split(key, 3)
    params = init_params(kp, INPUT_DIM, HID_SIZE, OUTPUT_DIM)
    ew_bf16 = _elementwise_bf16_ok()

    # Case 1: feature-major path (no wrapper transposes), batch=512, two
    # 256-wide tiles -> exercises the parallel grid; bf16 MXU for layers 2/3
    # with f32 layer 1 and f32 accumulate.
    xT = jax.random.normal(kx, (INPUT_DIM, 512), dtype=jnp.float32)
    out_fm = jax.block_until_ready(
        fn_net_forward_fm(xT, *params, batch_tile=256, use_bf16=True))
    ref1 = jax.block_until_ready(
        reference_forward(xT.T, *params, use_bf16=True, bf16_tanh=ew_bf16))
    assert out_fm.shape == (OUTPUT_DIM, 512)
    err1 = float(jnp.max(jnp.abs(out_fm.T - ref1)))
    assert err1 < 5e-3, err1

    # Case 2: batch-major compatibility wrapper, ragged batch (tail-tile
    # padding), full-f32 math -> tight match against the reference.
    x2 = jax.random.normal(kx2, (300, INPUT_DIM), dtype=jnp.float32)
    out2 = jax.block_until_ready(
        fn_net_forward(x2, *params, batch_tile=256, use_bf16=False))
    ref2 = jax.block_until_ready(
        reference_forward(x2, *params, use_bf16=False))
    assert out2.shape == (300, OUTPUT_DIM)
    err2 = float(jnp.max(jnp.abs(out2 - ref2)))
    assert err2 < 1e-4, err2

    print("KERNEL_OK")
</pallas_src>

<mosaic_0001>
module attributes {stable_mosaic.version = 11 : i64} {
  func.func @fn_net_kernel(%arg0: i32, %arg1: memref<4x256xf32, #tpu.memory_space<vmem>>, %arg2: memref<32x4xf32, #tpu.memory_space<vmem>>, %arg3: memref<32x1xf32, #tpu.memory_space<vmem>>, %arg4: memref<32x32xbf16, #tpu.memory_space<vmem>>, %arg5: memref<32x1xf32, #tpu.memory_space<vmem>>, %arg6: memref<2x32xbf16, #tpu.memory_space<vmem>>, %arg7: memref<2x1xf32, #tpu.memory_space<vmem>>, %arg8: memref<2x256xf32, #tpu.memory_space<vmem>>) attributes {dimension_semantics = [#tpu.dimension_semantics<parallel>], iteration_bounds = array<i64: 2>, scalar_prefetch = 0 : i64, scratch_operands = 0 : i64, tpu.core_type = #tpu.core_type<tc>, window_params = [{transform_indices = @transform_0, window_bounds = array<i64: 4, 256>}, {pipeline_mode = #tpu.pipeline_mode<synchronous>, transform_indices = @transform_1, window_bounds = array<i64: 32, 4>}, {pipeline_mode = #tpu.pipeline_mode<synchronous>, transform_indices = @transform_2, window_bounds = array<i64: 32, 1>}, {pipeline_mode = #tpu.pipeline_mode<synchronous>, transform_indices = @transform_3, window_bounds = array<i64: 32, 32>}, {pipeline_mode = #tpu.pipeline_mode<synchronous>, transform_indices = @transform_4, window_bounds = array<i64: 32, 1>}, {pipeline_mode = #tpu.pipeline_mode<synchronous>, transform_indices = @transform_5, window_bounds = array<i64: 2, 32>}, {pipeline_mode = #tpu.pipeline_mode<synchronous>, transform_indices = @transform_6, window_bounds = array<i64: 2, 1>}, {transform_indices = @transform_7, window_bounds = array<i64: 2, 256>}]} {
    %c0 = arith.constant 0 : index
    %c0_0 = arith.constant 0 : index
    %0 = vector.load %arg1[%c0, %c0_0] : memref<4x256xf32, #tpu.memory_space<vmem>>, vector<4x256xf32>
    %c0_1 = arith.constant 0 : index
    %c0_2 = arith.constant 0 : index
    %1 = vector.load %arg2[%c0_1, %c0_2] : memref<32x4xf32, #tpu.memory_space<vmem>>, vector<32x4xf32>
    %cst = arith.constant dense<0.000000e+00> : vector<32x256xf32>
    %2 = tpu.matmul %1, %0, %cst {dimension_numbers = #tpu.dot_dimension_numbers<[1], [0], [0], [1], [0, 0, 1, 1], [], []>} : vector<32x4xf32>, vector<4x256xf32>, vector<32x256xf32> -> vector<32x256xf32>
    %c0_3 = arith.constant 0 : index
    %c0_4 = arith.constant 0 : index
    %3 = vector.load %arg3[%c0_3, %c0_4] : memref<32x1xf32, #tpu.memory_space<vmem>>, vector<32x1xf32>
    %4 = vector.broadcast %3 : vector<32x1xf32> to vector<32x256xf32>
    %5 = arith.addf %2, %4 : vector<32x256xf32>
    %6 = math.tanh %5 : vector<32x256xf32>
    %c0_5 = arith.constant 0 : index
    %c0_6 = arith.constant 0 : index
    %7 = vector.load %arg4[%c0_5, %c0_6] : memref<32x32xbf16, #tpu.memory_space<vmem>>, vector<32x32xbf16>
    %8 = arith.truncf %6 : vector<32x256xf32> to vector<32x256xbf16>
    %cst_7 = arith.constant dense<0.000000e+00> : vector<32x256xf32>
    %9 = tpu.matmul %7, %8, %cst_7 {dimension_numbers = #tpu.dot_dimension_numbers<[1], [0], [0], [1], [0, 0, 1, 1], [], []>} : vector<32x32xbf16>, vector<32x256xbf16>, vector<32x256xf32> -> vector<32x256xf32>
    %c0_8 = arith.constant 0 : index
    %c0_9 = arith.constant 0 : index
    %10 = vector.load %arg5[%c0_8, %c0_9] : memref<32x1xf32, #tpu.memory_space<vmem>>, vector<32x1xf32>
    %11 = vector.broadcast %10 : vector<32x1xf32> to vector<32x256xf32>
    %12 = arith.addf %9, %11 : vector<32x256xf32>
    %13 = math.tanh %12 : vector<32x256xf32>
    %c0_10 = arith.constant 0 : index
    %c0_11 = arith.constant 0 : index
    %14 = vector.load %arg6[%c0_10, %c0_11] : memref<2x32xbf16, #tpu.memory_space<vmem>>, vector<2x32xbf16>
    %15 = arith.truncf %13 : vector<32x256xf32> to vector<32x256xbf16>
    %cst_12 = arith.constant dense<0.000000e+00> : vector<2x256xf32>
    %16 = tpu.matmul %14, %15, %cst_12 {dimension_numbers = #tpu.dot_dimension_numbers<[1], [0], [0], [1], [0, 0, 1, 1], [], []>} : vector<2x32xbf16>, vector<32x256xbf16>, vector<2x256xf32> -> vector<2x256xf32>
    %c0_13 = arith.constant 0 : index
    %c0_14 = arith.constant 0 : index
    %17 = vector.load %arg7[%c0_13, %c0_14] : memref<2x1xf32, #tpu.memory_space<vmem>>, vector<2x1xf32>
    %18 = vector.broadcast %17 : vector<2x1xf32> to vector<2x256xf32>
    %19 = arith.addf %16, %18 : vector<2x256xf32>
    %c0_15 = arith.constant 0 : index
    %c0_16 = arith.constant 0 : index
    %20 = vector.load %arg8[%c0_15, %c0_16] : memref<2x256xf32, #tpu.memory_space<vmem>>, vector<2x256xf32>
    tpu.vector_store %arg8[%c0_15, %c0_16], %19 {strides = array<i32>} : memref<2x256xf32, #tpu.memory_space<vmem>>, vector<2x256xf32>,
    return
  }
  func.func @transform_0(%arg0: i32) -> (i32, i32) {
    %c0_i32 = arith.constant 0 : i32
    %c0_i32_0 = arith.constant 0 : i32
    return %c0_i32, %arg0 : i32, i32
  }
  func.func @transform_1(%arg0: i32) -> (i32, i32) {
    %c0_i32 = arith.constant 0 : i32
    %c0_i32_0 = arith.constant 0 : i32
    %c0_i32_1 = arith.constant 0 : i32
    return %c0_i32, %c0_i32_0 : i32, i32
  }
  func.func @transform_2(%arg0: i32) -> (i32, i32) {
    %c0_i32 = arith.constant 0 : i32
    %c0_i32_0 = arith.constant 0 : i32
    %c0_i32_1 = arith.constant 0 : i32
    return %c0_i32, %c0_i32_0 : i32, i32
  }
  func.func @transform_3(%arg0: i32) -> (i32, i32) {
    %c0_i32 = arith.constant 0 : i32
    %c0_i32_0 = arith.constant 0 : i32
    %c0_i32_1 = arith.constant 0 : i32
    return %c0_i32, %c0_i32_0 : i32, i32
  }
  func.func @transform_4(%arg0: i32) -> (i32, i32) {
    %c0_i32 = arith.constant 0 : i32
    %c0_i32_0 = arith.constant 0 : i32
    %c0_i32_1 = arith.constant 0 : i32
    return %c0_i32, %c0_i32_0 : i32, i32
  }
  func.func @transform_5(%arg0: i32) -> (i32, i32) {
    %c0_i32 = arith.constant 0 : i32
    %c0_i32_0 = arith.constant 0 : i32
    %c0_i32_1 = arith.constant 0 : i32
    return %c0_i32, %c0_i32_0 : i32, i32
  }
  func.func @transform_6(%arg0: i32) -> (i32, i32) {
    %c0_i32 = arith.constant 0 : i32
    %c0_i32_0 = arith.constant 0 : i32
    %c0_i32_1 = arith.constant 0 : i32
    return %c0_i32, %c0_i32_0 : i32, i32
  }
  func.func @transform_7(%arg0: i32) -> (i32, i32) {
    %c0_i32 = arith.constant 0 : i32
    %c0_i32_0 = arith.constant 0 : i32
    return %c0_i32, %arg0 : i32, i32
  }
}

</mosaic_0001>

<llo_original>
// kernel: _fn_net_fm_call.1
$region0: #{_fn_net_fm_call.1}
  #allocation0 [shape = 'u32[]', space=smem, size = 0x4, offset = 0x4, fixed_abs, tag = 'smem constant byte address 0x4 - core index']
  #allocation1 [shape = 'u32[144,128]{1,0:T(1,128)}', space=vmem, size = 0x12000, scoped, tag = 'internal scratch']
  %s0 = inlined_call_operand.vmem [shape: f32[4,512], index: 0, kind: input, shape index: {}]
  %s1 = inlined_call_operand.vmem [shape: f32[32,4], index: 1, kind: input, shape index: {}]
  %s2 = inlined_call_operand.vmem [shape: f32[32,1], index: 2, kind: input, shape index: {}]
  %s3 = inlined_call_operand.vmem [shape: bf16[32,32], index: 3, kind: input, shape index: {}]
  %s4 = inlined_call_operand.vmem [shape: f32[32,1], index: 4, kind: input, shape index: {}]
  %s5 = inlined_call_operand.vmem [shape: bf16[2,32], index: 5, kind: input, shape index: {}]
  %s6 = inlined_call_operand.vmem [shape: f32[2,1], index: 6, kind: input, shape index: {}]
  %s7 = inlined_call_operand.hbm [shape: f32[2,512], index: 7, kind: output, shape index: {}]
  %s8 = sld [smem:[#allocation0]]
  $region61: #{_fn_net_fm_call.1} parent=0
    _
  %s10 = ssub.s32 1, %s8
  %s11 = scalar_select 0, %s10, %s8
  $region1: #{_fn_net_fm_call.1} parent=0
    #allocation2 [shape = 'u8[4096]{0}', space=vmem, size = 0x1000, scoped, tag = 'output window, operand 0']
    #allocation3 [shape = 's32[2]{0}', space=sflag, size = 0x8, scoped, tag = 'scoped memory for _fn_net_fm_call.1']
    %12 = vsyncpa [#allocation3], 0
    %s13 = scalar_lea.sflag [#allocation3], 1
    %14 = vsyncpa %s13, 0
    loop: start=0, step=1, limit=4
    $region2: #{_fn_net_fm_call.1} parent=1 // loop_pre_header
      _
    $region3: #{_fn_net_fm_call.1} parent=1 // loop_header
      %s16 = sphi 0, %s20
      %p17 = scmp.ge.s32.totalorder %s16, 4
      %s26 = sphi 0, %s28
      %s29 = sphi 0, %s26
      %s30 = sphi 0, %s29
      %s46 = sphi 0, %s30
      %s50 = sphi 0, %s50
      %s52 = sphi 0, %s50
      %s53 = sphi 0, %s52
      %s67 = sphi 0, %s53
      %s71 = sphi 0, %s71
      %s73 = sphi 0, %s71
      %s74 = sphi 0, %s73
      %s88 = sphi 0, %s74
      %s92 = sphi 0, %s92
      %s94 = sphi 0, %s92
      %s95 = sphi 0, %s94
      %s109 = sphi 0, %s95
      %s113 = sphi 0, %s113
      %s115 = sphi 0, %s113
      %s116 = sphi 0, %s115
      %s130 = sphi 0, %s116
      %s134 = sphi 0, %s134
      %s136 = sphi 0, %s134
      %s137 = sphi 0, %s136
      %s151 = sphi 0, %s137
      %s155 = sphi 0, %s155
      %s157 = sphi 0, %s155
      %s158 = sphi 0, %s157
      %s172 = sphi 0, %s158
      %s178 = sphi 0, %s180
      %s181 = sphi 0, %s178
      %s182 = sphi 0, %s181
      %s198 = sphi 0, %s182
    $region4: #{_fn_net_fm_call.1} parent=1 // loop_header_branch
      %19 = sbr.rel (%p17) target = $region8
    $region5: #{_fn_net_fm_call.1} parent=1 // loop_body
      %s21 = ssub.s32 %s16, 1
      %s22 = ssub.s32 %s16, 2
      %s23 = sadd.s32 %s16, 1
      %s24 = ssub.s32 %s16, %s23
      %p25 = scmp.eq.s32.totalorder %s24, 0
      %s27 = sadd.s32 %s26, 1
      %s28 = scalar_select %p25, %s26, %s27
      %p31 = pneg %p25
      %p32 = scmp.eq.s32.totalorder %s16, 1
      %p33 = por %p31, %p32
      %p34 = scmp.ne.s32.totalorder %s26, %s29
      %p35 = scmp.eq.s32.totalorder %s16, 0
      %p36 = por %p34, %p35
      %p37 = scmp.ne.s32.totalorder %s26, %s29
      %p38 = scmp.eq.s32.totalorder %s21, 1
      %p39 = por %p37, %p38
      %p40 = scmp.ne.s32.totalorder %s29, %s30
      %p41 = scmp.eq.s32.totalorder %s21, 0
      %p42 = por %p40, %p41
      %p43 = scmp.ne.s32.totalorder %s29, %s30
      %p44 = scmp.eq.s32.totalorder %s22, 1
      %p45 = por %p43, %p44
      %p47 = scmp.ne.s32.totalorder %s30, %s46
      %p48 = scmp.eq.s32.totalorder %s22, 0
      %p49 = por %p47, %p48
      %s51 = sadd.s32 %s50, 1
      %p54 = scmp.eq.s32.totalorder %s16, 1
      %p55 = scmp.ne.s32.totalorder %s50, %s52
      %p56 = scmp.eq.s32.totalorder %s16, 0
      %p57 = por %p55, %p56
      %p58 = scmp.ne.s32.totalorder %s50, %s52
      %p59 = scmp.eq.s32.totalorder %s21, 1
      %p60 = por %p58, %p59
      %p61 = scmp.ne.s32.totalorder %s52, %s53
      %p62 = scmp.eq.s32.totalorder %s21, 0
      %p63 = por %p61, %p62
      %p64 = scmp.ne.s32.totalorder %s52, %s53
      %p65 = scmp.eq.s32.totalorder %s22, 1
      %p66 = por %p64, %p65
      %p68 = scmp.ne.s32.totalorder %s53, %s67
      %p69 = scmp.eq.s32.totalorder %s22, 0
      %p70 = por %p68, %p69
      %s72 = sadd.s32 %s71, 1
      %p75 = scmp.eq.s32.totalorder %s16, 1
      %p76 = scmp.ne.s32.totalorder %s71, %s73
      %p77 = scmp.eq.s32.totalorder %s16, 0
      %p78 = por %p76, %p77
      %p79 = scmp.ne.s32.totalorder %s71, %s73
      %p80 = scmp.eq.s32.totalorder %s21, 1
      %p81 = por %p79, %p80
      %p82 = scmp.ne.s32.totalorder %s73, %s74
      %p83 = scmp.eq.s32.totalorder %s21, 0
      %p84 = por %p82, %p83
      %p85 = scmp.ne.s32.totalorder %s73, %s74
      %p86 = scmp.eq.s32.totalorder %s22, 1
      %p87 = por %p85, %p86
      %p89 = scmp.ne.s32.totalorder %s74, %s88
      %p90 = scmp.eq.s32.totalorder %s22, 0
      %p91 = por %p89, %p90
      %s93 = sadd.s32 %s92, 1
      %p96 = scmp.eq.s32.totalorder %s16, 1
      %p97 = scmp.ne.s32.totalorder %s92, %s94
      %p98 = scmp.eq.s32.totalorder %s16, 0
      %p99 = por %p97, %p98
      %p100 = scmp.ne.s32.totalorder %s92, %s94
      %p101 = scmp.eq.s32.totalorder %s21, 1
      %p102 = por %p100, %p101
      %p103 = scmp.ne.s32.totalorder %s94, %s95
      %p104 = scmp.eq.s32.totalorder %s21, 0
      %p105 = por %p103, %p104
      %p106 = scmp.ne.s32.totalorder %s94, %s95
      %p107 = scmp.eq.s32.totalorder %s22, 1
      %p108 = por %p106, %p107
      %p110 = scmp.ne.s32.totalorder %s95, %s109
      %p111 = scmp.eq.s32.totalorder %s22, 0
      %p112 = por %p110, %p111
      %s114 = sadd.s32 %s113, 1
      %p117 = scmp.eq.s32.totalorder %s16, 1
      %p118 = scmp.ne.s32.totalorder %s113, %s115
      %p119 = scmp.eq.s32.totalorder %s16, 0
      %p120 = por %p118, %p119
      %p121 = scmp.ne.s32.totalorder %s113, %s115
      %p122 = scmp.eq.s32.totalorder %s21, 1
      %p123 = por %p121, %p122
      %p124 = scmp.ne.s32.totalorder %s115, %s116
      %p125 = scmp.eq.s32.totalorder %s21, 0
      %p126 = por %p124, %p125
      %p127 = scmp.ne.s32.totalorder %s115, %s116
      %p128 = scmp.eq.s32.totalorder %s22, 1
      %p129 = por %p127, %p128
      %p131 = scmp.ne.s32.totalorder %s116, %s130
      %p132 = scmp.eq.s32.totalorder %s22, 0
      %p133 = por %p131, %p132
      %s135 = sadd.s32 %s134, 1
      %p138 = scmp.eq.s32.totalorder %s16, 1
      %p139 = scmp.ne.s32.totalorder %s134, %s136
      %p140 = scmp.eq.s32.totalorder %s16, 0
      %p141 = por %p139, %p140
      %p142 = scmp.ne.s32.totalorder %s134, %s136
      %p143 = scmp.eq.s32.totalorder %s21, 1
      %p144 = por %p142, %p143
      %p145 = scmp.ne.s32.totalorder %s136, %s137
      %p146 = scmp.eq.s32.totalorder %s21, 0
      %p147 = por %p145, %p146
      %p148 = scmp.ne.s32.totalorder %s136, %s137
      %p149 = scmp.eq.s32.totalorder %s22, 1
      %p150 = por %p148, %p149
      %p152 = scmp.ne.s32.totalorder %s137, %s151
      %p153 = scmp.eq.s32.totalorder %s22, 0
      %p154 = por %p152, %p153
      %s156 = sadd.s32 %s155, 1
      %p159 = scmp.eq.s32.totalorder %s16, 1
      %p160 = scmp.ne.s32.totalorder %s155, %s157
      %p161 = scmp.eq.s32.totalorder %s16, 0
      %p162 = por %p160, %p161
      %p163 = scmp.ne.s32.totalorder %s155, %s157
      %p164 = scmp.eq.s32.totalorder %s21, 1
      %p165 = por %p163, %p164
      %p166 = scmp.ne.s32.totalorder %s157, %s158
      %p167 = scmp.eq.s32.totalorder %s21, 0
      %p168 = por %p166, %p167
      %p169 = scmp.ne.s32.totalorder %s157, %s158
      %p170 = scmp.eq.s32.totalorder %s22, 1
      %p171 = por %p169, %p170
      %p173 = scmp.ne.s32.totalorder %s158, %s172
      %p174 = scmp.eq.s32.totalorder %s22, 0
      %p175 = por %p173, %p174
      %s176 = ssub.s32 %s16, %s23
      %p177 = scmp.eq.s32.totalorder %s176, 0
      %s179 = sadd.s32 %s178, 1
      %s180 = scalar_select %p177, %s178, %s179
      %p183 = pneg %p177
      %p184 = scmp.eq.s32.totalorder %s16, 1
      %p185 = por %p183, %p184
      %p186 = scmp.ne.s32.totalorder %s178, %s181
      %p187 = scmp.eq.s32.totalorder %s16, 0
      %p188 = por %p186, %p187
      %p189 = scmp.ne.s32.totalorder %s178, %s181
      %p190 = scmp.eq.s32.totalorder %s21, 1
      %p191 = por %p189, %p190
      %p192 = scmp.ne.s32.totalorder %s181, %s182
      %p193 = scmp.eq.s32.totalorder %s21, 0
      %p194 = por %p192, %p193
      %p195 = scmp.ne.s32.totalorder %s181, %s182
      %p196 = scmp.eq.s32.totalorder %s22, 1
      %p197 = por %p195, %p196
      %p199 = scmp.ne.s32.totalorder %s182, %s198
      %p200 = scmp.eq.s32.totalorder %s22, 0
      %p201 = por %p199, %p200
      %p202 = scmp.le.s32.totalorder 1, %s16
      %p203 = scmp.lt.s32.totalorder %s16, 3
      %p204 = pnand %p202, %p203
      %p205 = pneg %p204
      // Predicated region
      $region9: #{_fn_net_fm_call.1} parent=5 // pred_check
        _
      $region10: #{_fn_net_fm_call.1} parent=5 // pred_check_branch
        %207 = sbr.rel (%p204) target = $region12
      $region11: #{_fn_net_fm_call.1} parent=5 // pred_region
        %s208 = ssub.s32 %s16, 1
        // Predicated region
        $region13: #{_fn_net_fm_call.1} parent=11 // pred_check
          %p209 = pneg %p63
        $region14: #{_fn_net_fm_call.1} parent=11 // pred_check_branch
          %211 = sbr.rel (%p209) target = $region16
        $region15: #{_fn_net_fm_call.1} parent=11 // pred_region
          _
        $region16: #{_fn_net_fm_call.1} parent=11 // pred_fallthru
          _
        // Predicated region
        $region17: #{_fn_net_fm_call.1} parent=11 // pred_check
          %p212 = pneg %p84
        $region18: #{_fn_net_fm_call.1} parent=11 // pred_check_branch
          %214 = sbr.rel (%p212) target = $region20
        $region19: #{_fn_net_fm_call.1} parent=11 // pred_region
          _
        $region20: #{_fn_net_fm_call.1} parent=11 // pred_fallthru
          _
        // Predicated region
        $region21: #{_fn_net_fm_call.1} parent=11 // pred_check
          %p215 = pneg %p105
        $region22: #{_fn_net_fm_call.1} parent=11 // pred_check_branch
          %217 = sbr.rel (%p215) target = $region24
        $region23: #{_fn_net_fm_call.1} parent=11 // pred_region
          _
        $region24: #{_fn_net_fm_call.1} parent=11 // pred_fallthru
          _
        // Predicated region
        $region25: #{_fn_net_fm_call.1} parent=11 // pred_check
          %p218 = pneg %p126
        $region26: #{_fn_net_fm_call.1} parent=11 // pred_check_branch
          %220 = sbr.rel (%p218) target = $region28
        $region27: #{_fn_net_fm_call.1} parent=11 // pred_region
          _
        $region28: #{_fn_net_fm_call.1} parent=11 // pred_fallthru
          _
        // Predicated region
        $region29: #{_fn_net_fm_call.1} parent=11 // pred_check
          %p221 = pneg %p147
        $region30: #{_fn_net_fm_call.1} parent=11 // pred_check_branch
          %223 = sbr.rel (%p221) target = $region32
        $region31: #{_fn_net_fm_call.1} parent=11 // pred_region
          _
        $region32: #{_fn_net_fm_call.1} parent=11 // pred_fallthru
          _
        // Predicated region
        $region33: #{_fn_net_fm_call.1} parent=11 // pred_check
          %p224 = pneg %p168
        $region34: #{_fn_net_fm_call.1} parent=11 // pred_check_branch
          %226 = sbr.rel (%p224) target = $region36
        $region35: #{_fn_net_fm_call.1} parent=11 // pred_region
          _
        $region36: #{_fn_net_fm_call.1} parent=11 // pred_fallthru
          _
      $region12: #{_fn_net_fm_call.1} parent=5 // pred_fallthru
        _
      %p227 = scmp.lt.s32.totalorder %s16, 2
      // Predicated region
      $region37: #{_fn_net_fm_call.1} parent=5 // pred_check
        %p228 = pneg %p227
      $region38: #{_fn_net_fm_call.1} parent=5 // pred_check_branch
        %230 = sbr.rel (%p228) target = $region40
      $region39: #{_fn_net_fm_call.1} parent=5 // pred_region
        // Predicated region
        $region41: #{_fn_net_fm_call.1} parent=39 // pred_check
          %p231 = pneg %p36
        $region42: #{_fn_net_fm_call.1} parent=39 // pred_check_branch
          %233 = sbr.rel (%p231) target = $region44
        $region43: #{_fn_net_fm_call.1} parent=39 // pred_region
          %s234 = smul.u32 2, %s16
          %p235 = scmp.lt.s32.totalorder %s234, 3
          %s236 = scalar_select %p235, %s234, 3
          %s237 = smul.addr %s236, 4
          %s238 = scalar_lea.vmem %s0, %s237
          %s239 = smul.u32 2, %s16
        $region44: #{_fn_net_fm_call.1} parent=39 // pred_fallthru
          _
      $region40: #{_fn_net_fm_call.1} parent=5 // pred_fallthru
        _
      %p240 = scmp.le.s32.totalorder 1, %s16
      %p241 = scmp.lt.s32.totalorder %s16, 3
      %p242 = pnand %p240, %p241
      %p243 = pneg %p242
      // Predicated region
      $region45: #{_fn_net_fm_call.1} parent=5 // pred_check
        _
      $region46: #{_fn_net_fm_call.1} parent=5 // pred_check_branch
        %245 = sbr.rel (%p242) target = $region48
      $region47: #{_fn_net_fm_call.1} parent=5 // pred_region
        %s246 = ssub.s32 %s16, 1
        %s247 = smul.u32 2, %s21
        %p248 = scmp.lt.s32.totalorder %s247, 3
        %s249 = scalar_select %p248, %s247, 3
        %s250 = smul.addr %s249, 4
        %s251 = scalar_lea.vmem %s0, %s250
        %p252 = pneg %p42
        %p253 = pneg %p39
        %p254 = pneg %p63
        %p255 = pneg %p60
        %p256 = pneg %p84
        %p257 = pneg %p81
        %p258 = pneg %p105
        %p259 = pneg %p102
        %p260 = pneg %p126
        %p261 = pneg %p123
        %p262 = pneg %p147
        %p263 = pneg %p144
        %p264 = pneg %p168
        %p265 = pneg %p165
        %p266 = pneg %p194
        %p267 = pneg %p191
        %s268 = sand.u32 %s181, 1
        %s269 = scalar_lea.sflag [#allocation3], %s268
        %s270 = sand.u32 %s181, 1
        %s271 = smul.addr %s270, 4
        %s272 = scalar_lea.vmem [#allocation2], %s271
        %s273 = smul.u32 2, %s21
        %p274 = scmp.lt.s32.totalorder %s273, 3
        %s275 = scalar_select %p274, %s273, 3
        %s276 = smul.addr %s275, 4
        %s277 = scalar_lea.vmem %s0, %s276
        %s278 = smul.u32 2, %s21
        %s279 = smul.u32 2, %s21
        %v281 = vld [vmem:[%s277] sm:$0xff]
        %v282 = vld [vmem:[%s1] sm:$0xff]
        %v283 = vld [vmem:[%s1 + $0x8] sm:$0xff]
        %v284 = vld [vmem:[%s1 + $0x10] sm:$0xff]
        %v285 = vld [vmem:[%s1 + $0x18] sm:$0xff]
        %v286 = vld [vmem:[%s2] sm:$0xff]
        %v287 = vld [vmem:[%s2 + $0x8] sm:$0xff]
        %v288 = vld [vmem:[%s2 + $0x10] sm:$0xff]
        %v289 = vld [vmem:[%s2 + $0x18] sm:$0xff]
        %291 = vset.pattern.permute.xlu0 0
        %292 = vperm.xlu0 %291, %v286
        %v293 = vpop.permute.xlu0 %292
        %296 = vset.pattern.permute.xlu0 0
        %297 = vperm.xlu0 %296, %v287
        %v298 = vpop.permute.xlu0 %297
        %301 = vset.pattern.permute.xlu0 0
        %302 = vperm.xlu0 %301, %v288
        %v303 = vpop.permute.xlu0 %302
        %306 = vset.pattern.permute.xlu0 0
        %307 = vperm.xlu0 %306, %v289
        %v308 = vpop.permute.xlu0 %307
        %v311 = vcombine.high %v281, %v281
        %vm312 = vcmask 31744
        %v314 = vsel %vm312, %v282, 0
        %v317 = vsel %vm312, %v283, 0
        %v320 = vsel %vm312, %v284, 0
        %v323 = vsel %vm312, %v285, 0
        %vm325 = vcmask 1043456
        %v326 = vsel %vm325, %v281, 0
        %v328 = vsel %vm325, %v311, 0
        %330 = vmatprep.subr.mxu0 0.0
        %331 = vmatpush1.msra.mxu0 0.0
        %332 = vmatprep.subr.mxu0 0.0
        %333 = vmatpush1.msra.mxu0 0.0
        %334 = vmatprep.subr.mxu0 0.0
        %335 = vmatpush1.msra.mxu0 0.0
        %336 = vmatprep.subr.mxu0 0.0
        %337 = vmatpush1.msra.mxu0 0.0
        %338 = vmatprep.subr.mxu0 0.0
        %339 = vmatpush1.msra.mxu0 0.0
        %340 = vmatprep.subr.mxu0 0.0
        %341 = vmatpush1.msra.mxu0 0.0
        %342 = vmatprep.subr.mxu0 0.0
        %343 = vmatpush1.msra.mxu0 0.0
        %344 = vmatprep.subr.mxu0 0.0
        %345 = vmatpush1.msra.mxu0 0.0
        %346 = vmatprep.subr.mxu0 0.0
        %347 = vmatpush1.msra.mxu0 0.0
        %348 = vmatprep.subr.mxu0 0.0
        %349 = vmatpush1.msra.mxu0 0.0
        %350 = vmatprep.subr.mxu0 0.0
        %351 = vmatpush1.msra.mxu0 0.0
        %352 = vmatprep.subr.mxu0 0.0
        %353 = vmatpush1.msra.mxu0 0.0
        %354 = vmatprep.subr.mxu0 0.0
        %355 = vmatpush1.msra.mxu0 0.0
        %356 = vmatprep.subr.mxu0 0.0
        %357 = vmatpush1.msra.mxu0 0.0
        %358 = vmatprep.subr.mxu0 0.0
        %359 = vmatpush1.msra.mxu0 0.0
        %360 = vmatprep.subr.mxu0 %v328
        %361 = vmatpush1.msra.mxu0 %v326
        %362 = vmatprep.subr.mxu0 0.0
        %363 = vmatpush2.msra.mxu0 0.0
        %364 = vmatprep.subr.mxu0 0.0
        %365 = vmatpush2.msra.mxu0 0.0
        %366 = vmatprep.subr.mxu0 0.0
        %367 = vmatpush2.msra.mxu0 0.0
        %368 = vmatprep.subr.mxu0 0.0
        %369 = vmatpush2.msra.mxu0 0.0
        %370 = vmatprep.subr.mxu0 0.0
        %371 = vmatpush2.msra.mxu0 0.0
        %372 = vmatprep.subr.mxu0 0.0
        %373 = vmatpush2.msra.mxu0 0.0
        %374 = vmatprep.subr.mxu0 0.0
        %375 = vmatpush2.msra.mxu0 0.0
        %376 = vmatprep.subr.mxu0 0.0
        %377 = vmatpush2.msra.mxu0 0.0
        %378 = vmatprep.subr.mxu0 0.0
        %379 = vmatpush2.msra.mxu0 0.0
        %380 = vmatprep.subr.mxu0 0.0
        %381 = vmatpush2.msra.mxu0 0.0
        %382 = vmatprep.subr.mxu0 0.0
        %383 = vmatpush2.msra.mxu0 0.0
        %384 = vmatprep.subr.mxu0 0.0
        %385 = vmatpush2.msra.mxu0 0.0
        %386 = vmatprep.subr.mxu0 0.0
        %387 = vmatpush2.msra.mxu0 0.0
        %388 = vmatprep.subr.mxu0 0.0
        %389 = vmatpush2.msra.mxu0 0.0
        %390 = vmatprep.subr.mxu0 0.0
        %391 = vmatpush2.msra.mxu0 0.0
        %392 = vmatprep.subr.mxu0 0.0
        %393 = vmatpush2.msra.mxu0 0.0
        %394 = vmatprep.mubr.f32.mxu0 0.0
        %395 = vmatmul.mubr.f32.gmra.mxu0 %v314
        %v396 = vpop.f32.mrf.mxu0
        %v397 = vadd.f32 %v293, %v396
        %v398 = vpop.f32.mrf.mxu0
        %v399 = vadd.f32 %v293, %v398
        %400 = vmatprep.mubr.f32.mxu0 0.0
        %401 = vmatmul.mubr.f32.gmra.mxu0 %v317
        %v402 = vpop.f32.mrf.mxu0
        %v403 = vadd.f32 %v298, %v402
        %v404 = vpop.f32.mrf.mxu0
        %v405 = vadd.f32 %v298, %v404
        %406 = vmatprep.mubr.f32.mxu0 0.0
        %407 = vmatmul.mubr.f32.gmra.mxu0 %v320
        %v408 = vpop.f32.mrf.mxu0
        %v409 = vadd.f32 %v303, %v408
        %v410 = vpop.f32.mrf.mxu0
        %v411 = vadd.f32 %v303, %v410
        %412 = vmatprep.mubr.f32.mxu0 0.0
        %413 = vmatmul.mubr.f32.gmra.mxu0 %v323
        %v414 = vpop.f32.mrf.mxu0
        %v415 = vadd.f32 %v308, %v414
        %v416 = vpop.f32.mrf.mxu0
        %v417 = vadd.f32 %v308, %v416
        %418 = vdwg.mxu0
        %v419 = vtanh.pop %v397
        %v420 = vtanh.pop %v399
        %v421 = vtanh.pop %v403
        %v422 = vtanh.pop %v405
        %v423 = vtanh.pop %v409
        %v424 = vtanh.pop %v411
        %v425 = vtanh.pop %v415
        %v426 = vtanh.pop %v417
        %v427 = vld [vmem:[%s3] sm:$0xf]
        %v428 = vld [vmem:[%s3 + $0x4] sm:$0xf]
        %v429 = vld [vmem:[%s3 + $0x8] sm:$0xf]
        %v430 = vld [vmem:[%s3 + $0xc] sm:$0xf]
        %v431 = vpack.c.bf16 %v421, %v419
        %v432 = vpack.c.bf16 %v422, %v420
        %v433 = vpack.c.bf16 %v425, %v423
        %v434 = vpack.c.bf16 %v426, %v424
        %v435 = vld [vmem:[%s4] sm:$0xff]
        %v436 = vld [vmem:[%s4 + $0x8] sm:$0xff]
        %v437 = vld [vmem:[%s4 + $0x10] sm:$0xff]
        %v438 = vld [vmem:[%s4 + $0x18] sm:$0xff]
        %440 = vset.pattern.permute.xlu0 0
        %441 = vperm.xlu0 %440, %v435
        %v442 = vpop.permute.xlu0 %441
        %445 = vset.pattern.permute.xlu0 0
        %446 = vperm.xlu0 %445, %v436
        %v447 = vpop.permute.xlu0 %446
        %450 = vset.pattern.permute.xlu0 0
        %451 = vperm.xlu0 %450, %v437
        %v452 = vpop.permute.xlu0 %451
        %455 = vset.pattern.permute.xlu0 0
        %456 = vperm.xlu0 %455, %v438
        %v457 = vpop.permute.xlu0 %456
        %v463 = vunpack.c.l.b16 %v427
        %v464 = vunpack.c.l.b16 %v428
        %v465 = vunpack.c.l.b16 %v429
        %v466 = vunpack.c.l.b16 %v430
        %v467 = vpack.c.b16 %v464, %v463
        %v468 = vpack.c.b16 %v466, %v465
        %vm469 = vcmask 261120
        %v471 = vsel %vm469, %v467, 0
        %v474 = vsel %vm469, %v468, 0
        %476 = vmatprep.subr.bf16.mxu0 0
        %477 = vmatpush1.bf16.msra.mxu0 0
        %478 = vmatprep.subr.bf16.mxu0 0
        %479 = vmatpush1.bf16.msra.mxu0 0
        %480 = vmatprep.subr.bf16.mxu0 0
        %481 = vmatpush1.bf16.msra.mxu0 0
        %482 = vmatprep.subr.bf16.mxu0 0
        %483 = vmatpush1.bf16.msra.mxu0 0
        %484 = vmatprep.subr.bf16.mxu0 0
        %485 = vmatpush1.bf16.msra.mxu0 0
        %486 = vmatprep.subr.bf16.mxu0 0
        %487 = vmatpush1.bf16.msra.mxu0 0
        %488 = vmatprep.subr.bf16.mxu0 %v434
        %489 = vmatpush1.bf16.msra.mxu0 %v433
        %490 = vmatprep.subr.bf16.mxu0 %v432
        %491 = vmatpush1.bf16.msra.mxu0 %v431
        %492 = vmatprep.subr.bf16.mxu0 0
        %493 = vmatpush2.bf16.msra.mxu0 0
        %494 = vmatprep.subr.bf16.mxu0 0
        %495 = vmatpush2.bf16.msra.mxu0 0
        %496 = vmatprep.subr.bf16.mxu0 0
        %497 = vmatpush2.bf16.msra.mxu0 0
        %498 = vmatprep.subr.bf16.mxu0 0
        %499 = vmatpush2.bf16.msra.mxu0 0
        %500 = vmatprep.subr.bf16.mxu0 0
        %501 = vmatpush2.bf16.msra.mxu0 0
        %502 = vmatprep.subr.bf16.mxu0 0
        %503 = vmatpush2.bf16.msra.mxu0 0
        %504 = vmatprep.subr.bf16.mxu0 0
        %505 = vmatpush2.bf16.msra.mxu0 0
        %506 = vmatprep.subr.bf16.mxu0 0
        %507 = vmatpush2.bf16.msra.mxu0 0
        %508 = vmatprep.mubr.bf16.mxu0 0
        %509 = vmatmul.mubr.bf16.gmra.mxu0 %v471
        %v510 = vpop.f32.mrf.mxu0
        %v511 = vadd.f32 %v442, %v510
        %v512 = vpop.f32.mrf.mxu0
        %v513 = vadd.f32 %v442, %v512
        %v514 = vpop.f32.mrf.mxu0
        %v515 = vadd.f32 %v447, %v514
        %v516 = vpop.f32.mrf.mxu0
        %v517 = vadd.f32 %v447, %v516
        %518 = vmatprep.mubr.bf16.mxu0 0
        %519 = vmatmul.mubr.bf16.gmra.mxu0 %v474
        %v520 = vpop.f32.mrf.mxu0
        %v521 = vadd.f32 %v452, %v520
        %v522 = vpop.f32.mrf.mxu0
        %v523 = vadd.f32 %v452, %v522
        %v524 = vpop.f32.mrf.mxu0
        %v525 = vadd.f32 %v457, %v524
        %v526 = vpop.f32.mrf.mxu0
        %v527 = vadd.f32 %v457, %v526
        %528 = vdwg.mxu0
        %v529 = vtanh.pop %v511
        %v530 = vtanh.pop %v513
        %v531 = vtanh.pop %v515
        %v532 = vtanh.pop %v517
        %v533 = vtanh.pop %v521
        %v534 = vtanh.pop %v523
        %v535 = vtanh.pop %v525
        %v536 = vtanh.pop %v527
        %v537 = vld [vmem:[%s5] sm:$0x1]
        %v538 = vpack.c.bf16 %v531, %v529
        %v539 = vpack.c.bf16 %v532, %v530
        %v540 = vpack.c.bf16 %v535, %v533
        %v541 = vpack.c.bf16 %v536, %v534
        %v542 = vld [vmem:[%s6] sm:$0x3]
        %544 = vset.pattern.permute.xlu0 0
        %545 = vperm.xlu0 %544, %v542
        %v546 = vpop.permute.xlu0 %545
        %v549 = vsel %vm469, %v537, 0
        %551 = vmatprep.subr.bf16.mxu0 0
        %552 = vmatpush1.bf16.msra.mxu0 0
        %553 = vmatprep.subr.bf16.mxu0 0
        %554 = vmatpush1.bf16.msra.mxu0 0
        %555 = vmatprep.subr.bf16.mxu0 0
        %556 = vmatpush1.bf16.msra.mxu0 0
        %557 = vmatprep.subr.bf16.mxu0 0
        %558 = vmatpush1.bf16.msra.mxu0 0
        %559 = vmatprep.subr.bf16.mxu0 0
        %560 = vmatpush1.bf16.msra.mxu0 0
        %561 = vmatprep.subr.bf16.mxu0 0
        %562 = vmatpush1.bf16.msra.mxu0 0
        %563 = vmatprep.subr.bf16.mxu0 %v541
        %564 = vmatpush1.bf16.msra.mxu0 %v540
        %565 = vmatprep.subr.bf16.mxu0 %v539
        %566 = vmatpush1.bf16.msra.mxu0 %v538
        %567 = vmatprep.subr.bf16.mxu0 0
        %568 = vmatpush2.bf16.msra.mxu0 0
        %569 = vmatprep.subr.bf16.mxu0 0
        %570 = vmatpush2.bf16.msra.mxu0 0
        %571 = vmatprep.subr.bf16.mxu0 0
        %572 = vmatpush2.bf16.msra.mxu0 0
        %573 = vmatprep.subr.bf16.mxu0 0
        %574 = vmatpush2.bf16.msra.mxu0 0
        %575 = vmatprep.subr.bf16.mxu0 0
        %576 = vmatpush2.bf16.msra.mxu0 0
        %577 = vmatprep.subr.bf16.mxu0 0
        %578 = vmatpush2.bf16.msra.mxu0 0
        %579 = vmatprep.subr.bf16.mxu0 0
        %580 = vmatpush2.bf16.msra.mxu0 0
        %581 = vmatprep.subr.bf16.mxu0 0
        %582 = vmatpush2.bf16.msra.mxu0 0
        %583 = vmatprep.mubr.bf16.mxu0 0
        %584 = vmatmul.mubr.bf16.gmra.mxu0 %v549
        %v585 = vpop.f32.mrf.mxu0
        %v586 = vadd.f32 %v546, %v585
        %v587 = vpop.f32.mrf.mxu0
        %v588 = vadd.f32 %v546, %v587
        %v589 = vpop.f32.mrf.mxu0
        %v590 = vpop.f32.mrf.mxu0
        %591 = vdwg.mxu0
        %v594 = vcombine.low %v586, %v588
        %v596 = vunpack.c.l.s4 1983009808
        %v597 = vunpack.c.0.s8 %v596
        %v598 = vlaneseq
        %v599 = vshrl.u32 %v598, 7
        %v600 = vsub.s32 %v597, %v599
        %v601 = vrot.slane %v594, %v600
        %603 = vst [vmem:[%s272] sm:$0xf] %v601
        %s604 = sand.u32 %s181, 1
        %s605 = scalar_lea.sflag [#allocation3], %s604
        %s606 = sand.u32 %s181, 1
        %s607 = smul.addr %s606, 4
        %s608 = scalar_lea.vmem [#allocation2], %s607
        // Predicated region
        $region49: #{_fn_net_fm_call.1} parent=47 // pred_check
          %p609 = pneg %p191
        $region50: #{_fn_net_fm_call.1} parent=47 // pred_check_branch
          %611 = sbr.rel (%p609) target = $region52
        $region51: #{_fn_net_fm_call.1} parent=47 // pred_region
          %s612 = smul.u32 2, %s21
          %s614 = ssub.s32 64, 64
          %615 = vsyncadd %s605, %s614
          %s616 = smul.addr %s612, 32
          %s617 = scalar_lea.hbm %s7, %s616
          %s619 = sshll.u32 %s608, 4
          %s620 = int_to_ptr.vmem [resolvable:$true] %s619
          %622 = dma.vmem_to_hbm [thread:$0]  %s620, 64, %s617, %s605
        $region52: #{_fn_net_fm_call.1} parent=47 // pred_fallthru
          _
      $region48: #{_fn_net_fm_call.1} parent=5 // pred_fallthru
        _
      %p623 = scmp.le.s32.totalorder 2, %s16
      // Predicated region
      $region53: #{_fn_net_fm_call.1} parent=5 // pred_check
        %p624 = pneg %p623
      $region54: #{_fn_net_fm_call.1} parent=5 // pred_check_branch
        %626 = sbr.rel (%p624) target = $region56
      $region55: #{_fn_net_fm_call.1} parent=5 // pred_region
        %s627 = ssub.s32 %s16, 2
        // Predicated region
        $region57: #{_fn_net_fm_call.1} parent=55 // pred_check
          %p628 = pneg %p197
        $region58: #{_fn_net_fm_call.1} parent=55 // pred_check_branch
          %630 = sbr.rel (%p628) target = $region60
        $region59: #{_fn_net_fm_call.1} parent=55 // pred_region
          %s631 = sand.u32 %s182, 1
          %s632 = scalar_lea.sflag [#allocation3], %s631
          %s633 = sand.u32 %s182, 1
          %s634 = smul.addr %s633, 4
          %s635 = scalar_lea.vmem [#allocation2], %s634
          %636 = dma.done %s632, 64
        $region60: #{_fn_net_fm_call.1} parent=55 // pred_fallthru
          _
      $region56: #{_fn_net_fm_call.1} parent=5 // pred_fallthru
        _
    $region6: #{_fn_net_fm_call.1} parent=1 // loop_footer
      %s20 = sadd.s32 1, %s16
    $region7: #{_fn_net_fm_call.1} parent=1 // loop_footer_branch
      %15 = sbr.rel target = $region3
    $region8: #{_fn_net_fm_call.1} parent=1 // loop_exit
      _
    %637 = vsyncpa [#allocation3], 1
    %s638 = scalar_lea.sflag [#allocation3], 1
    %639 = vsyncpa %s638, 1

</llo_original>
